<compile_context>
chip_gen: v5e
topology: v5e:2x2
jax: 0.10.0
libtpu: 0.0.40
codegen_flags: <defaults>
</compile_context>

<pallas_src>
import jax
import jax.numpy as jnp
from jax import lax
from jax.experimental import pallas as pl
from jax.experimental.pallas import tpu as pltpu


_LANE = 128
_TILE_CAP_M = 256
_TILE_CAP_N = 512
_FALLBACK_TK_CAP = 2048
# Conservative vs. the 32 MiB default scoped-VMEM limit (and v7x's 64 MiB
# physical VMEM) so no explicit vmem_limit_bytes override is needed.
_SINGLE_PASS_VMEM_BUDGET = 26 * 1024 * 1024


def _round_up(x, m):
    return ((x + m - 1) // m) * m


def _sublane_multiple(dtype):
    # f32 -> 8, bf16 -> 16, int8/fp8 -> 32 (vreg sublane packing).
    return max(8, 32 // jnp.dtype(dtype).itemsize)


def _pick_tile(dim, cap, mult):
    """Largest multiple of `mult` that divides `dim`, at most max(cap, mult)."""
    t = max((min(cap, dim) // mult) * mult, mult)
    while dim % t != 0:
        t -= mult
    return t


def _single_pass_kernel(lr_ref, x_ref, w_ref, b_ref, o_ref):
    # x_ref: (tm, K), w_ref: (tn, K), b_ref: (1, tn), o_ref: (tm, tn)
    acc = lax.dot_general(
        x_ref[...], w_ref[...],
        dimension_numbers=(((1,), (1,)), ((), ())),   # x @ W.T
        preferred_element_type=jnp.float32)
    o_ref[...] = ((acc + b_ref[...].astype(jnp.float32))
                  * lr_ref[0]).astype(o_ref.dtype)


def _k_grid_kernel(lr_ref, x_ref, w_ref, b_ref, o_ref, acc_ref):
    # Fallback for very large in_dim: f32 accumulator across the K grid axis.
    k = pl.program_id(2)

    @pl.when(k == 0)
    def _():
        acc_ref[...] = jnp.zeros_like(acc_ref)

    acc_ref[...] += lax.dot_general(
        x_ref[...], w_ref[...],
        dimension_numbers=(((1,), (1,)), ((), ())),
        preferred_element_type=jnp.float32)

    @pl.when(k == pl.num_programs(2) - 1)
    def _():
        o_ref[...] = ((acc_ref[...] + b_ref[...].astype(jnp.float32))
                      * lr_ref[0]).astype(o_ref.dtype)


def equal_linear(x, weight, bias=None, lr_mul=1.0, *,
                 compute_dtype=None, tm=None, tn=None, tk=None):
    """Pallas TPU implementation of EqualLinear.forward.

    x: (..., in_dim), weight: (out_dim, in_dim), bias: (out_dim,)
    returns: (..., out_dim) with y = lr_mul * (x @ W.T + b).
    """
    orig_shape = x.shape
    in_dim = orig_shape[-1]
    out_dim, in_dim_w = weight.shape
    assert in_dim == in_dim_w, (in_dim, in_dim_w)
    if bias is None:
        bias = jnp.zeros((out_dim,), jnp.float32)

    out_dtype = x.dtype
    x2 = x.reshape(-1, in_dim)
    batch = x2.shape[0]

    in_dtype = jnp.dtype(compute_dtype) if compute_dtype is not None else jnp.dtype(x.dtype)
    in_itemsize = in_dtype.itemsize
    m_mult = _sublane_multiple(in_dtype)

    # Minimal-alignment padding (lane=128, sublane=m_mult).  User-provided
    # tile overrides additionally round their dim up so they always divide.
    M_pad = _round_up(batch, tm if tm else m_mult)
    K_pad = _round_up(in_dim, tk if tk else _LANE)
    N_pad = _round_up(out_dim, tn if tn else _LANE)

    # Tile selection: largest aligned divisor of the padded dim, <= caps.
    auto_split = tm is None and tn is None
    if tm is None:
        tm = _pick_tile(M_pad, _TILE_CAP_M, m_mult)
    if tn is None:
        tn = _pick_tile(N_pad, _TILE_CAP_N, _LANE)

    # v7x has 2 TensorCores: if the whole problem would be one grid program,
    # split N (or M) so the "parallel" grid has >= 2 programs.
    if auto_split and (M_pad // tm) * (N_pad // tn) == 1:
        if N_pad >= 2 * _LANE:
            tn = _pick_tile(N_pad, N_pad // 2, _LANE)
        elif M_pad >= 2 * m_mult:
            tm = _pick_tile(M_pad, M_pad // 2, m_mult)

    grid_m = M_pad // tm
    grid_n = N_pad // tn

    # Pad only ragged dims (zero K padding is matmul-neutral; padded M rows /
    # N lanes are sliced off below).  Aligned layer sizes: no copies at all.
    # Storing the parameters pre-padded outside the hot path avoids even the
    # ragged-case copy.
    x_p = x2 if (M_pad, K_pad) == x2.shape else jnp.pad(
        x2, ((0, M_pad - batch), (0, K_pad - in_dim)))
    w_p = weight if (N_pad, K_pad) == weight.shape else jnp.pad(
        weight, ((0, N_pad - out_dim), (0, K_pad - in_dim)))
    b_p = bias if N_pad == out_dim else jnp.pad(bias, (0, N_pad - out_dim))
    b2d = b_p.reshape(1, N_pad)

    if compute_dtype is not None:
        x_p = x_p.astype(compute_dtype)
        w_p = w_p.astype(compute_dtype)

    # lr_mul as an SMEM scalar: one compiled kernel for all lr_mul values.
    lr_arr = jnp.full((1,), lr_mul, dtype=jnp.float32)

    out_itemsize = jnp.dtype(out_dtype).itemsize
    bias_itemsize = jnp.dtype(b2d.dtype).itemsize

    def footprint(tk_):
        return (2 * tm * tk_ * in_itemsize        # x block (double-buffered)
                + 2 * tn * tk_ * in_itemsize      # W block
                + 2 * tn * bias_itemsize          # bias block
                + 2 * tm * tn * out_itemsize)     # out block

    single_pass = ((tk is None or tk >= K_pad)
                   and footprint(K_pad) <= _SINGLE_PASS_VMEM_BUDGET)

    flops = 2 * M_pad * N_pad * K_pad
    bytes_accessed = (x_p.size * in_itemsize + w_p.size * in_itemsize
                      + b2d.size * bias_itemsize + M_pad * N_pad * out_itemsize)
    cost = pl.CostEstimate(flops=flops, transcendentals=0,
                           bytes_accessed=bytes_accessed)

    lr_spec = pl.BlockSpec(memory_space=pltpu.MemorySpace.SMEM)

    if single_pass:
        out = pl.pallas_call(
            _single_pass_kernel,
            out_shape=jax.ShapeDtypeStruct((M_pad, N_pad), out_dtype),
            grid_spec=pltpu.PrefetchScalarGridSpec(
                num_scalar_prefetch=0,
                grid=(grid_m, grid_n),
                in_specs=[
                    lr_spec,                                          # lr_mul
                    pl.BlockSpec((tm, K_pad), lambda i, j: (i, 0)),   # x strip
                    pl.BlockSpec((tn, K_pad), lambda i, j: (j, 0)),   # W strip
                    pl.BlockSpec((1, tn), lambda i, j: (0, j)),       # bias
                ],
                out_specs=pl.BlockSpec((tm, tn), lambda i, j: (i, j)),
            ),
            compiler_params=pltpu.CompilerParams(
                dimension_semantics=("parallel", "parallel")),
            cost_estimate=cost,
        )(lr_arr, x_p, w_p, b2d)
    else:
        if tk is None:
            tk = _pick_tile(K_pad, _FALLBACK_TK_CAP, _LANE)
        grid_k = K_pad // tk
        out = pl.pallas_call(
            _k_grid_kernel,
            out_shape=jax.ShapeDtypeStruct((M_pad, N_pad), out_dtype),
            grid_spec=pltpu.PrefetchScalarGridSpec(
                num_scalar_prefetch=0,
                grid=(grid_m, grid_n, grid_k),
                in_specs=[
                    lr_spec,                                             # lr_mul
                    pl.BlockSpec((tm, tk), lambda i, j, k: (i, k)),      # x tile
                    pl.BlockSpec((tn, tk), lambda i, j, k: (j, k)),      # W tile
                    pl.BlockSpec((1, tn), lambda i, j, k: (0, j)),       # bias
                ],
                out_specs=pl.BlockSpec((tm, tn), lambda i, j, k: (i, j)),
                scratch_shapes=[pltpu.VMEM((tm, tn), jnp.float32)],
            ),
            compiler_params=pltpu.CompilerParams(
                dimension_semantics=("parallel", "parallel", "arbitrary")),
            cost_estimate=cost,
        )(lr_arr, x_p, w_p, b2d)

    if (M_pad, N_pad) != (batch, out_dim):
        out = out[:batch, :out_dim]
    return out.reshape(*orig_shape[:-1], out_dim)


if __name__ == "__main__":
    key = jax.random.PRNGKey(0)
    k_x, k_w, k_b, k_x2, k_w2, k_x3, k_w3, k_b3 = jax.random.split(key, 8)

    # --- Test 1: small module-like shapes (ragged K/N padded to 128,
    #             single-pass kernel path).
    batch, in_dim, out_dim = 8, 32, 32
    lr_mul = 0.5
    weight = jax.random.normal(k_w, (out_dim, in_dim), dtype=jnp.float32)
    bias = 0.01 * jnp.arange(out_dim, dtype=jnp.float32)
    x = jax.random.normal(k_x, (batch, in_dim), dtype=jnp.float32)

    y = jax.block_until_ready(equal_linear(x, weight, bias, lr_mul=lr_mul))
    y_ref = x @ (weight * lr_mul).T + bias * lr_mul
    assert y.shape == (batch, out_dim)
    assert jnp.allclose(y, y_ref, atol=1e-5, rtol=1e-5)

    # --- Test 2: force small tiles so the K-grid accumulator fallback
    #             (pl.when init + epilogue) is actually exercised.
    batch2, in_dim2, out_dim2 = 16, 256, 256
    weight2 = jax.random.normal(k_w2, (out_dim2, in_dim2), dtype=jnp.float32)
    bias2 = jax.random.normal(k_b, (out_dim2,), dtype=jnp.float32)
    x2 = jax.random.normal(k_x2, (batch2, in_dim2), dtype=jnp.float32)

    y2 = jax.block_until_ready(
        equal_linear(x2, weight2, bias2, lr_mul=0.01, tm=8, tn=128, tk=128))
    y2_ref = x2 @ (weight2 * 0.01).T + bias2 * 0.01
    assert y2.shape == (batch2, out_dim2)
    assert jnp.allclose(y2, y2_ref, atol=1e-4, rtol=1e-4)

    # --- Test 3: ragged in/out dims + leading batch dims (auto tiles,
    #             minimal-alignment padding, multi-program parallel grid).
    in_dim3, out_dim3 = 200, 300
    weight3 = jax.random.normal(k_w3, (out_dim3, in_dim3), dtype=jnp.float32)
    bias3 = jax.random.normal(k_b3, (out_dim3,), dtype=jnp.float32)
    x3 = jax.random.normal(k_x3, (2, 5, in_dim3), dtype=jnp.float32)

    y3 = jax.block_until_ready(equal_linear(x3, weight3, bias3, lr_mul=0.7))
    y3_ref = x3 @ (weight3 * 0.7).T + bias3 * 0.7
    assert y3.shape == (2, 5, out_dim3)
    assert jnp.allclose(y3, y3_ref, atol=1e-3, rtol=1e-4)

    print("KERNEL_OK")
</pallas_src>

<mosaic_0001>
module attributes {stable_mosaic.version = 11 : i64} {
  func.func @_single_pass_kernel(%arg0: i32, %arg1: i32, %arg2: memref<1xf32, #tpu.memory_space<smem>>, %arg3: memref<8x128xf32, #tpu.memory_space<vmem>>, %arg4: memref<128x128xf32, #tpu.memory_space<vmem>>, %arg5: memref<1x128xf32, #tpu.memory_space<vmem>>, %arg6: memref<8x128xf32, #tpu.memory_space<vmem>>) attributes {dimension_semantics = [#tpu.dimension_semantics<parallel>, #tpu.dimension_semantics<parallel>], iteration_bounds = array<i64: 1, 1>, scalar_prefetch = 0 : i64, scratch_operands = 0 : i64, tpu.core_type = #tpu.core_type<tc>, window_params = [{transform_indices = @transform_0, window_bounds = array<i64: 1>}, {transform_indices = @transform_1, window_bounds = array<i64: 8, 128>}, {transform_indices = @transform_2, window_bounds = array<i64: 128, 128>}, {transform_indices = @transform_3, window_bounds = array<i64: 1, 128>}, {transform_indices = @transform_4, window_bounds = array<i64: 8, 128>}]} {
    %c0 = arith.constant 0 : index
    %c0_0 = arith.constant 0 : index
    %0 = vector.load %arg3[%c0, %c0_0] : memref<8x128xf32, #tpu.memory_space<vmem>>, vector<8x128xf32>
    %c0_1 = arith.constant 0 : index
    %c0_2 = arith.constant 0 : index
    %1 = vector.load %arg4[%c0_1, %c0_2] : memref<128x128xf32, #tpu.memory_space<vmem>>, vector<128x128xf32>
    %cst = arith.constant dense<0.000000e+00> : vector<8x128xf32>
    %2 = tpu.matmul %0, %1, %cst {dimension_numbers = #tpu.dot_dimension_numbers<[1], [1], [0], [0], [0, 0, 1, 0], [], []>} : vector<8x128xf32>, vector<128x128xf32>, vector<8x128xf32> -> vector<8x128xf32>
    %c0_3 = arith.constant 0 : index
    %c0_4 = arith.constant 0 : index
    %3 = vector.load %arg5[%c0_3, %c0_4] : memref<1x128xf32, #tpu.memory_space<vmem>>, vector<1x128xf32>
    %4 = vector.broadcast %3 : vector<1x128xf32> to vector<8x128xf32>
    %5 = arith.addf %2, %4 : vector<8x128xf32>
    %c0_5 = arith.constant 0 : index
    %6 = memref.load %arg2[%c0_5] : memref<1xf32, #tpu.memory_space<smem>>
    %7 = vector.broadcast %6 : f32 to vector<8x128xf32>
    %8 = arith.mulf %5, %7 : vector<8x128xf32>
    %c0_6 = arith.constant 0 : index
    %c0_7 = arith.constant 0 : index
    %9 = vector.load %arg6[%c0_6, %c0_7] : memref<8x128xf32, #tpu.memory_space<vmem>>, vector<8x128xf32>
    tpu.vector_store %arg6[%c0_6, %c0_7], %8 {strides = array<i32>} : memref<8x128xf32, #tpu.memory_space<vmem>>, vector<8x128xf32>,
    return
  }
  func.func @transform_0(%arg0: i32, %arg1: i32) -> i32 {
    %c0_i32 = arith.constant 0 : i32
    %c0_i32_0 = arith.constant 0 : i32
    return %c0_i32 : i32
  }
  func.func @transform_1(%arg0: i32, %arg1: i32) -> (i32, i32) {
    %c0_i32 = arith.constant 0 : i32
    %c0_i32_0 = arith.constant 0 : i32
    return %arg0, %c0_i32 : i32, i32
  }
  func.func @transform_2(%arg0: i32, %arg1: i32) -> (i32, i32) {
    %c0_i32 = arith.constant 0 : i32
    %c0_i32_0 = arith.constant 0 : i32
    return %arg1, %c0_i32 : i32, i32
  }
  func.func @transform_3(%arg0: i32, %arg1: i32) -> (i32, i32) {
    %c0_i32 = arith.constant 0 : i32
    %c0_i32_0 = arith.constant 0 : i32
    return %c0_i32, %arg1 : i32, i32
  }
  func.func @transform_4(%arg0: i32, %arg1: i32) -> (i32, i32) {
    %c0_i32 = arith.constant 0 : i32
    return %arg0, %arg1 : i32, i32
  }
}

</mosaic_0001>

<llo_original>
// kernel: tpu_custom_call.1
$region0: #{tpu_custom_call.1}
  #allocation0 [shape = 'u32[]', space=smem, size = 0x4, offset = 0x4, fixed_abs, tag = 'smem constant byte address 0x4 - core index']
  #allocation1 [shape = 'u32[72,128]{1,0:T(1,128)}', space=vmem, size = 0x9000, scoped, tag = 'internal scratch']
  #allocation2 [shape = 'f32[1]{0:T(128)S(6)}', space=smem, size = 0x200, scoped, tag = 'scoped memory for tpu_custom_call.1']
  %s0 = inlined_call_operand.<no memory space> [shape: f32[1], index: 0, kind: input, shape index: {}]
  %s1 = inlined_call_operand.hbm [shape: f32[8,128], index: 1, kind: input, shape index: {}]
  %s2 = inlined_call_operand.hbm [shape: f32[128,128], index: 2, kind: input, shape index: {}]
  %s3 = inlined_call_operand.vmem [shape: f32[1,128], index: 3, kind: input, shape index: {}]
  %s4 = inlined_call_operand.hbm [shape: f32[8,128], index: 4, kind: output, shape index: {}]
  %s5 = sld [smem:[#allocation0]]
  $region34: #{tpu_custom_call.1} parent=0
    _
  %s7 = ssub.s32 1, %s5
  %s8 = scalar_select 0, %s7, %s5
  %9 = sst [smem:[#allocation2]] %s0
  $region1: #{tpu_custom_call.1} parent=0
    #allocation3 [shape = 'u8[4096]{0}', space=vmem, size = 0x1000, scoped, tag = 'input window, operand 1, single buffered']
    #allocation4 [shape = 's32[1]{0}', space=sflag, size = 0x4, scoped, tag = 'scoped memory for tpu_custom_call.1']
    #allocation5 [shape = 's32[1]{0}', space=sflag, size = 0x4, scoped, tag = 'scoped memory for tpu_custom_call.1']
    #allocation6 [shape = 'u8[65536]{0}', space=vmem, size = 0x10000, scoped, tag = 'input window, operand 2, single buffered']
    #allocation7 [shape = 's32[1]{0}', space=sflag, size = 0x4, scoped, tag = 'scoped memory for tpu_custom_call.1']
    #allocation8 [shape = 'u8[4096]{0}', space=vmem, size = 0x1000, scoped, tag = 'output window, operand 0, single buffered']
    %10 = vsyncpa [#allocation4], 0
    %11 = vsyncpa [#allocation7], 0
    %12 = vsyncpa [#allocation5], 0
    // Predicated region
    $region2: #{tpu_custom_call.1} parent=1 // pred_check
      _
    $region3: #{tpu_custom_call.1} parent=1 // pred_check_branch
      %14 = sbr.rel (0) target = $region5
    $region4: #{tpu_custom_call.1} parent=1 // pred_region
      _
    $region5: #{tpu_custom_call.1} parent=1 // pred_fallthru
      _
    // Predicated region
    $region6: #{tpu_custom_call.1} parent=1 // pred_check
      _
    $region7: #{tpu_custom_call.1} parent=1 // pred_check_branch
      %16 = sbr.rel (0) target = $region9
    $region8: #{tpu_custom_call.1} parent=1 // pred_region
      %18 = vsyncadd [#allocation4], 0
      %s20 = sshll.u32 %s1, 4
      %s21 = int_to_ptr.hbm [resolvable:$true] %s20
      %s22 = sshll.u32 [#allocation3], 4
      %s23 = int_to_ptr.vmem [resolvable:$true] %s22
      %25 = dma.hbm_to_vmem [thread:$0]  %s21, 128, %s23, [#allocation4]
    $region9: #{tpu_custom_call.1} parent=1 // pred_fallthru
      _
    // Predicated region
    $region10: #{tpu_custom_call.1} parent=1 // pred_check
      _
    $region11: #{tpu_custom_call.1} parent=1 // pred_check_branch
      %27 = sbr.rel (0) target = $region13
    $region12: #{tpu_custom_call.1} parent=1 // pred_region
      %29 = vsyncadd [#allocation7], 0
      %s30 = sshll.u32 %s2, 4
      %s31 = int_to_ptr.hbm [resolvable:$true] %s30
      %s32 = sshll.u32 [#allocation6], 4
      %s33 = int_to_ptr.vmem [resolvable:$true] %s32
      %38 = dma.hbm_to_vmem [thread:$0]  %s31, 2048, %s33, [#allocation7], 128, 128, 8
    $region13: #{tpu_custom_call.1} parent=1 // pred_fallthru
      _
    // Predicated region
    $region14: #{tpu_custom_call.1} parent=1 // pred_check
      _
    $region15: #{tpu_custom_call.1} parent=1 // pred_check_branch
      %40 = sbr.rel (0) target = $region17
    $region16: #{tpu_custom_call.1} parent=1 // pred_region
      _
    $region17: #{tpu_custom_call.1} parent=1 // pred_fallthru
      _
    // Predicated region
    $region18: #{tpu_custom_call.1} parent=1 // pred_check
      _
    $region19: #{tpu_custom_call.1} parent=1 // pred_check_branch
      %42 = sbr.rel (0) target = $region21
    $region20: #{tpu_custom_call.1} parent=1 // pred_region
      %44 = dma.done [#allocation4], 128
    $region21: #{tpu_custom_call.1} parent=1 // pred_fallthru
      _
    // Predicated region
    $region22: #{tpu_custom_call.1} parent=1 // pred_check
      _
    $region23: #{tpu_custom_call.1} parent=1 // pred_check_branch
      %46 = sbr.rel (0) target = $region25
    $region24: #{tpu_custom_call.1} parent=1 // pred_region
      %48 = dma.done [#allocation7], 2048
    $region25: #{tpu_custom_call.1} parent=1 // pred_fallthru
      _
    %v49 = vld [vmem:[#allocation3] sm:$0xff]
    %v50 = vld [vmem:[#allocation6] sm:$0xff]
    %v51 = vld [vmem:[#allocation6 + $0x8] sm:$0xff]
    %v52 = vld [vmem:[#allocation6 + $0x10] sm:$0xff]
    %v53 = vld [vmem:[#allocation6 + $0x18] sm:$0xff]
    %v54 = vld [vmem:[#allocation6 + $0x20] sm:$0xff]
    %v55 = vld [vmem:[#allocation6 + $0x28] sm:$0xff]
    %v56 = vld [vmem:[#allocation6 + $0x30] sm:$0xff]
    %v57 = vld [vmem:[#allocation6 + $0x38] sm:$0xff]
    %v58 = vld [vmem:[#allocation6 + $0x40] sm:$0xff]
    %v59 = vld [vmem:[#allocation6 + $0x48] sm:$0xff]
    %v60 = vld [vmem:[#allocation6 + $0x50] sm:$0xff]
    %v61 = vld [vmem:[#allocation6 + $0x58] sm:$0xff]
    %v62 = vld [vmem:[#allocation6 + $0x60] sm:$0xff]
    %v63 = vld [vmem:[#allocation6 + $0x68] sm:$0xff]
    %v64 = vld [vmem:[#allocation6 + $0x70] sm:$0xff]
    %v65 = vld [vmem:[#allocation6 + $0x78] sm:$0xff]
    %v66 = vld [vmem:[%s3] sm:$0x1]
    %v68 = vperm.slane %v66, 0
    %70 = vmatpush.xpose.msra.mxu0 %v65
    %71 = vmatpush.xpose.msra.mxu0 %v64
    %72 = vmatpush.xpose.msra.mxu0 %v63
    %73 = vmatpush.xpose.msra.mxu0 %v62
    %74 = vmatpush.xpose.msra.mxu0 %v61
    %75 = vmatpush.xpose.msra.mxu0 %v60
    %76 = vmatpush.xpose.msra.mxu0 %v59
    %77 = vmatpush.xpose.msra.mxu0 %v58
    %78 = vmatpush.xpose.msra.mxu0 %v57
    %79 = vmatpush.xpose.msra.mxu0 %v56
    %80 = vmatpush.xpose.msra.mxu0 %v55
    %81 = vmatpush.xpose.msra.mxu0 %v54
    %82 = vmatpush.xpose.msra.mxu0 %v53
    %83 = vmatpush.xpose.msra.mxu0 %v52
    %84 = vmatpush.xpose.msra.mxu0 %v51
    %85 = vmatpush.xpose.msra.mxu0 %v50
    %86 = vmatmul.f32.gmra.mxu0 %v49
    %v87 = vpop.f32.mrf.mxu0
    %v88 = vadd.f32 %v68, %v87
    %89 = vdwg.mxu0
    %s90 = sld [smem:[#allocation2]]
    %v91 = vstv %s90
    %v92 = vmul.f32 %v88, %v91
    %93 = vst [vmem:[#allocation8] sm:$0xff] %v92
    // Predicated region
    $region26: #{tpu_custom_call.1} parent=1 // pred_check
      _
    $region27: #{tpu_custom_call.1} parent=1 // pred_check_branch
      %95 = sbr.rel (0) target = $region29
    $region28: #{tpu_custom_call.1} parent=1 // pred_region
      %97 = vsyncadd [#allocation5], 0
      %s99 = sshll.u32 [#allocation8], 4
      %s100 = int_to_ptr.vmem [resolvable:$true] %s99
      %s101 = sshll.u32 %s4, 4
      %s102 = int_to_ptr.hbm [resolvable:$true] %s101
      %104 = dma.vmem_to_hbm [thread:$0]  %s100, 128, %s102, [#allocation5]
    $region29: #{tpu_custom_call.1} parent=1 // pred_fallthru
      _
    // Predicated region
    $region30: #{tpu_custom_call.1} parent=1 // pred_check
      _
    $region31: #{tpu_custom_call.1} parent=1 // pred_check_branch
      %106 = sbr.rel (0) target = $region33
    $region32: #{tpu_custom_call.1} parent=1 // pred_region
      %108 = dma.done [#allocation5], 128
    $region33: #{tpu_custom_call.1} parent=1 // pred_fallthru
      _
    %109 = vsyncpa [#allocation4], 1
    %110 = vsyncpa [#allocation7], 1
    %111 = vsyncpa [#allocation5], 1

</llo_original>
